<compile_context>
chip_gen: v5e
topology: v5e:2x2
jax: 0.10.0
libtpu: 0.0.40
codegen_flags: <defaults>
</compile_context>

<pallas_src>
import functools

import jax
import jax.numpy as jnp
from jax.experimental import pallas as pl
from jax.experimental.pallas import tpu as pltpu


# --------------------------------------------------------------------------- #
# Pallas kernel: fused OutputLayer for `groups` stacked weight sets.
# --------------------------------------------------------------------------- #
def _fused_output_layer_kernel(x_ref, w1_ref, b1_ref, lnw_ref, lnb_ref,
                               w2_ref, b2_ref, o_ref, *, eps, groups, n_out):
    # relu(x @ W1 + b1) -> TF LayerNorm -> (dropout = identity at eval) -> @ W2 + b2
    # Everything after the x load stays in VMEM / vregs; only (row_tile, groups*n_out)
    # logits are stored back.
    x = x_ref[...].astype(jnp.float32)
    for g in range(groups):                                   # static, 1 or 2
        h = jnp.dot(x, w1_ref[g], preferred_element_type=jnp.float32) + b1_ref[g]
        h = jnp.maximum(h, 0.0)
        # Two-pass (centered) statistics: exact match to the PyTorch reference,
        # no E[x^2]-E[x]^2 cancellation.  Data is already resident, so the
        # extra VALU pass hides under the x DMA.
        u = jnp.mean(h, axis=-1, keepdims=True)
        c = h - u
        var = jnp.mean(c * c, axis=-1, keepdims=True)
        y = lnw_ref[g] * (c * jax.lax.rsqrt(var + eps)) + lnb_ref[g]
        out_g = jnp.dot(y, w2_ref[g], preferred_element_type=jnp.float32) + b2_ref[g]
        o_ref[:, g * n_out:(g + 1) * n_out] = out_g.astype(o_ref.dtype)


def _pick_row_tile(rows, d, h, groups, n_out, itemsize, row_align):
    """Generation-aware row tile + scoped-VMEM limit."""
    try:
        vmem_cap = int(getattr(pltpu.get_tpu_info(), "vmem_capacity_bytes",
                               128 * 2**20))
    except Exception:
        vmem_cap = 128 * 2**20
    small_vmem = vmem_cap <= 64 * 2**20            # v7x-class: 64 MiB / TC, 2 TCs
    max_row_tile = 512 if small_vmem else 1024

    n_total = groups * n_out
    # Weights use constant index maps; budget 2x in case they get double-buffered.
    weight_bytes = 2 * 4 * groups * (d * h + 3 * h + h * n_out + n_out)
    # Double-buffered x / out blocks plus ~3 live f32 (row_tile, h) intermediates
    # and the f32 copy of x.
    per_row_bytes = 2 * d * itemsize + 2 * n_total * itemsize + 4 * (d + 3 * h)

    budget = (24 if small_vmem else 32) * 2**20
    avail = max(budget - weight_bytes, per_row_bytes * row_align)
    tile = min(max_row_tile, avail // per_row_bytes)

    # Keep a few grid steps for pipelining (8 on two-TC v7x, 4 on v5e/v6e),
    # but never shrink below 512 rows just to create steps.
    min_steps = 8 if small_vmem else 4
    while tile > 512 and pl.cdiv(rows, tile) < min_steps:
        tile //= 2

    tile = max(row_align, (int(tile) // row_align) * row_align)
    if tile >= rows:
        tile = rows            # single full-extent block is always a legal shape

    vmem_limit = weight_bytes + tile * per_row_bytes + (4 << 20)
    vmem_limit = int(min((40 if small_vmem else 48) * 2**20,
                         max(vmem_limit, 16 * 2**20)))
    return int(tile), vmem_limit


def fused_output_layer(x, w1, b1, ln_w, ln_b, w2, b2, eps=1e-12, row_tile=None):
    """Fused OutputLayer over `G` stacked weight sets.

    x:    (..., d)
    w1:   (G, d, h)        b1: (G, h)
    ln_w: (G, h)           ln_b: (G, h)
    w2:   (G, h, n)        b2: (G, n)
    returns (..., G * n)   (the G per-group outputs concatenated).
    """
    orig_shape = x.shape
    d = int(orig_shape[-1])
    rows = 1
    for s in orig_shape[:-1]:
        rows *= int(s)

    G, d_w, h = (int(s) for s in w1.shape)
    assert d_w == d, "W1 input dim mismatch"
    n = int(w2.shape[-1])
    n_total = G * n

    dtype = x.dtype
    itemsize = jnp.dtype(dtype).itemsize
    row_align = 8 if itemsize >= 4 else (16 if itemsize == 2 else 32)

    if row_tile is None:
        row_tile, vmem_limit = _pick_row_tile(rows, d, h, G, n, itemsize, row_align)
    else:
        row_tile = max(1, min(int(row_tile), rows))
        vmem_limit = 48 * 2**20

    x2 = x.reshape(rows, d)
    w1f = w1.astype(jnp.float32)
    b1f = b1.reshape(G, 1, h).astype(jnp.float32)
    lnwf = ln_w.reshape(G, 1, h).astype(jnp.float32)
    lnbf = ln_b.reshape(G, 1, h).astype(jnp.float32)
    w2f = w2.astype(jnp.float32)
    b2f = b2.reshape(G, 1, n).astype(jnp.float32)

    grid = (pl.cdiv(rows, row_tile),)

    out = pl.pallas_call(
        functools.partial(_fused_output_layer_kernel,
                          eps=float(eps), groups=G, n_out=n),
        out_shape=jax.ShapeDtypeStruct((rows, n_total), dtype),
        grid_spec=pltpu.PrefetchScalarGridSpec(
            num_scalar_prefetch=0,
            grid=grid,
            in_specs=[
                pl.BlockSpec((row_tile, d), lambda i: (i, 0)),
                pl.BlockSpec((G, d, h), lambda i: (0, 0, 0)),
                pl.BlockSpec((G, 1, h), lambda i: (0, 0, 0)),
                pl.BlockSpec((G, 1, h), lambda i: (0, 0, 0)),
                pl.BlockSpec((G, 1, h), lambda i: (0, 0, 0)),
                pl.BlockSpec((G, h, n), lambda i: (0, 0, 0)),
                pl.BlockSpec((G, 1, n), lambda i: (0, 0, 0)),
            ],
            out_specs=pl.BlockSpec((row_tile, n_total), lambda i: (i, 0)),
        ),
        compiler_params=pltpu.CompilerParams(
            dimension_semantics=("parallel",),
            vmem_limit_bytes=vmem_limit,
        ),
    )(x2, w1f, b1f, lnwf, lnbf, w2f, b2f)

    return out.reshape(orig_shape[:-1] + (n_total,))


# --------------------------------------------------------------------------- #
# PredictionLayer composition (return_yp=False path).
# --------------------------------------------------------------------------- #
def prediction_layer_forward(context_input, context_mask, params, eps=1e-12):
    # Merged start/end branch: weights stacked on a leading group axis so one
    # fused kernel pass reads context_input once and emits both logits.
    s, e = params["start"], params["end"]
    se = fused_output_layer(
        context_input,
        jnp.stack([s["w1"], e["w1"]]), jnp.stack([s["b1"], e["b1"]]),
        jnp.stack([s["ln_w"], e["ln_w"]]), jnp.stack([s["ln_b"], e["ln_b"]]),
        jnp.stack([s["w2"], e["w2"]]), jnp.stack([s["b2"], e["b2"]]),
        eps=eps)                                                   # (B, S, 2)
    start = se[..., 0] - 1e30 * (1.0 - context_mask)
    end = se[..., 1] - 1e30 * (1.0 - context_mask)

    t = params["type"]
    typ = fused_output_layer(
        context_input[:, 0, :],
        t["w1"][None], t["b1"][None], t["ln_w"][None], t["ln_b"][None],
        t["w2"][None], t["b2"][None], eps=eps)                     # (B, 4)
    # Dropout: identity at inference.  # TODO(synk): train-mode dropout RNG not implemented.
    # TODO(synk): return_yp=True span-argmax path (triu/tril window mask, yp1/yp2) not implemented.
    return start, end, typ


# --------------------------------------------------------------------------- #
# Pure-JAX references for correctness checks.
# --------------------------------------------------------------------------- #
def _ref_layernorm(x, w, b, eps=1e-12):
    u = jnp.mean(x, axis=-1, keepdims=True)
    s = jnp.mean((x - u) ** 2, axis=-1, keepdims=True)
    return w * ((x - u) / jnp.sqrt(s + eps)) + b


def _ref_output_layer(x, p, eps=1e-12):
    h = jnp.maximum(jnp.dot(x, p["w1"]) + p["b1"], 0.0)
    h = _ref_layernorm(h, p["ln_w"], p["ln_b"], eps)
    return jnp.dot(h, p["w2"]) + p["b2"]


def _ref_prediction_layer(context_input, context_mask, params):
    start = _ref_output_layer(context_input, params["start"]).squeeze(-1)
    start = start - 1e30 * (1.0 - context_mask)
    end = _ref_output_layer(context_input, params["end"]).squeeze(-1)
    end = end - 1e30 * (1.0 - context_mask)
    typ = _ref_output_layer(context_input[:, 0, :], params["type"])
    return start, end, typ


if __name__ == "__main__":
    batch, seq, input_dim = 2, 8, 32
    key = jax.random.PRNGKey(0)
    keys = jax.random.split(key, 4)

    context_input = jax.random.normal(keys[0], (batch, seq, input_dim), dtype=jnp.float32)
    lens = jnp.array([seq, seq - 3], dtype=jnp.int32)
    context_mask = (jnp.arange(seq)[None, :] < lens[:, None]).astype(jnp.float32)

    def make_output_params(k, d, num_answer):
        k1, k2, k3, k4, k5, k6 = jax.random.split(k, 6)
        return {
            "w1": 0.1 * jax.random.normal(k1, (d, 2 * d), jnp.float32),
            "b1": 0.1 * jax.random.normal(k2, (2 * d,), jnp.float32),
            # BertLayerNorm init is ones/zeros; perturb to exercise the affine path.
            "ln_w": 1.0 + 0.1 * jax.random.normal(k5, (2 * d,), jnp.float32),
            "ln_b": 0.1 * jax.random.normal(k6, (2 * d,), jnp.float32),
            "w2": 0.1 * jax.random.normal(k3, (2 * d, num_answer), jnp.float32),
            "b2": 0.1 * jax.random.normal(k4, (num_answer,), jnp.float32),
        }

    params = {
        "start": make_output_params(keys[1], input_dim, 1),
        "end": make_output_params(keys[2], input_dim, 1),
        "type": make_output_params(keys[3], input_dim, 4),
    }

    # Direct check of the fused OutputLayer kernel on the start branch.
    p = params["start"]
    out_start = fused_output_layer(
        context_input, p["w1"][None], p["b1"][None], p["ln_w"][None], p["ln_b"][None],
        p["w2"][None], p["b2"][None])
    out_start = jax.block_until_ready(out_start)
    ref_start = _ref_output_layer(context_input, p)
    assert out_start.shape == ref_start.shape == (batch, seq, 1)
    assert jnp.allclose(out_start, ref_start, atol=1e-4, rtol=1e-4), "fused OutputLayer mismatch"

    # Full PredictionLayer forward (return_yp=False path).
    start, end, typ = prediction_layer_forward(context_input, context_mask, params)
    start = jax.block_until_ready(start)
    end = jax.block_until_ready(end)
    typ = jax.block_until_ready(typ)

    start_ref, end_ref, typ_ref = _ref_prediction_layer(context_input, context_mask, params)
    assert start.shape == (batch, seq) and end.shape == (batch, seq) and typ.shape == (batch, 4)
    assert jnp.allclose(start, start_ref, atol=1e-4, rtol=1e-4), "start mismatch"
    assert jnp.allclose(end, end_ref, atol=1e-4, rtol=1e-4), "end mismatch"
    assert jnp.allclose(typ, typ_ref, atol=1e-4, rtol=1e-4), "type mismatch"

    print("KERNEL_OK")
</pallas_src>

<mosaic_0001>
module attributes {stable_mosaic.version = 11 : i64} {
  func.func @_fused_output_layer_kernel(%arg0: i32, %arg1: memref<16x32xf32, #tpu.memory_space<vmem>>, %arg2: memref<1x32x64xf32, #tpu.memory_space<vmem>>, %arg3: memref<1x1x64xf32, #tpu.memory_space<vmem>>, %arg4: memref<1x1x64xf32, #tpu.memory_space<vmem>>, %arg5: memref<1x1x64xf32, #tpu.memory_space<vmem>>, %arg6: memref<1x64x1xf32, #tpu.memory_space<vmem>>, %arg7: memref<1x1x1xf32, #tpu.memory_space<vmem>>, %arg8: memref<16x1xf32, #tpu.memory_space<vmem>>) attributes {dimension_semantics = [#tpu.dimension_semantics<parallel>], iteration_bounds = array<i64: 1>, scalar_prefetch = 0 : i64, scratch_operands = 0 : i64, tpu.core_type = #tpu.core_type<tc>, window_params = [{transform_indices = @transform_0, window_bounds = array<i64: 16, 32>}, {pipeline_mode = #tpu.pipeline_mode<synchronous>, transform_indices = @transform_1, window_bounds = array<i64: 1, 32, 64>}, {pipeline_mode = #tpu.pipeline_mode<synchronous>, transform_indices = @transform_2, window_bounds = array<i64: 1, 1, 64>}, {pipeline_mode = #tpu.pipeline_mode<synchronous>, transform_indices = @transform_3, window_bounds = array<i64: 1, 1, 64>}, {pipeline_mode = #tpu.pipeline_mode<synchronous>, transform_indices = @transform_4, window_bounds = array<i64: 1, 1, 64>}, {pipeline_mode = #tpu.pipeline_mode<synchronous>, transform_indices = @transform_5, window_bounds = array<i64: 1, 64, 1>}, {pipeline_mode = #tpu.pipeline_mode<synchronous>, transform_indices = @transform_6, window_bounds = array<i64: 1, 1, 1>}, {transform_indices = @transform_7, window_bounds = array<i64: 16, 1>}]} {
    %c0 = arith.constant 0 : index
    %c0_0 = arith.constant 0 : index
    %0 = vector.load %arg1[%c0, %c0_0] : memref<16x32xf32, #tpu.memory_space<vmem>>, vector<16x32xf32>
    %c0_1 = arith.constant 0 : index
    %c0_2 = arith.constant 0 : index
    %c0_3 = arith.constant 0 : index
    %1 = vector.load %arg2[%c0_1, %c0_2, %c0_3] : memref<1x32x64xf32, #tpu.memory_space<vmem>>, vector<1x32x64xf32>
    %2 = vector.shape_cast %1 : vector<1x32x64xf32> to vector<32x64xf32>
    %cst = arith.constant dense<0.000000e+00> : vector<16x64xf32>
    %3 = tpu.matmul %0, %2, %cst {dimension_numbers = #tpu.dot_dimension_numbers<[1], [0], [0], [1], [0, 0, 1, 1], [], []>} : vector<16x32xf32>, vector<32x64xf32>, vector<16x64xf32> -> vector<16x64xf32>
    %c0_4 = arith.constant 0 : index
    %c0_5 = arith.constant 0 : index
    %c0_6 = arith.constant 0 : index
    %4 = vector.load %arg3[%c0_4, %c0_5, %c0_6] : memref<1x1x64xf32, #tpu.memory_space<vmem>>, vector<1x1x64xf32>
    %5 = vector.shape_cast %4 : vector<1x1x64xf32> to vector<1x64xf32>
    %6 = vector.broadcast %5 : vector<1x64xf32> to vector<16x64xf32>
    %7 = arith.addf %3, %6 : vector<16x64xf32>
    %cst_7 = arith.constant 0.000000e+00 : f32
    %8 = vector.broadcast %cst_7 : f32 to vector<16x64xf32>
    %9 = arith.maximumf %7, %8 : vector<16x64xf32>
    %cst_8 = arith.constant dense<0.000000e+00> : vector<16xf32>
    %10 = vector.multi_reduction <add>, %9, %cst_8 [1] : vector<16x64xf32> to vector<16xf32>
    %11 = vector.shape_cast %10 : vector<16xf32> to vector<16x1xf32>
    %cst_9 = arith.constant 6.400000e+01 : f32
    %12 = vector.broadcast %cst_9 : f32 to vector<16x1xf32>
    %13 = arith.divf %11, %12 : vector<16x1xf32>
    %14 = vector.broadcast %13 : vector<16x1xf32> to vector<16x64xf32>
    %15 = arith.subf %9, %14 : vector<16x64xf32>
    %16 = arith.mulf %15, %15 : vector<16x64xf32>
    %cst_10 = arith.constant dense<0.000000e+00> : vector<16xf32>
    %17 = vector.multi_reduction <add>, %16, %cst_10 [1] : vector<16x64xf32> to vector<16xf32>
    %18 = vector.shape_cast %17 : vector<16xf32> to vector<16x1xf32>
    %cst_11 = arith.constant 6.400000e+01 : f32
    %19 = vector.broadcast %cst_11 : f32 to vector<16x1xf32>
    %20 = arith.divf %18, %19 : vector<16x1xf32>
    %c0_12 = arith.constant 0 : index
    %c0_13 = arith.constant 0 : index
    %c0_14 = arith.constant 0 : index
    %21 = vector.load %arg4[%c0_12, %c0_13, %c0_14] : memref<1x1x64xf32, #tpu.memory_space<vmem>>, vector<1x1x64xf32>
    %22 = vector.shape_cast %21 : vector<1x1x64xf32> to vector<1x64xf32>
    %cst_15 = arith.constant 9.99999996E-13 : f32
    %23 = vector.broadcast %cst_15 : f32 to vector<16x1xf32>
    %24 = arith.addf %20, %23 : vector<16x1xf32>
    %25 = math.rsqrt %24 : vector<16x1xf32>
    %26 = vector.broadcast %25 : vector<16x1xf32> to vector<16x64xf32>
    %27 = arith.mulf %15, %26 : vector<16x64xf32>
    %28 = vector.broadcast %22 : vector<1x64xf32> to vector<16x64xf32>
    %29 = arith.mulf %28, %27 : vector<16x64xf32>
    %c0_16 = arith.constant 0 : index
    %c0_17 = arith.constant 0 : index
    %c0_18 = arith.constant 0 : index
    %30 = vector.load %arg5[%c0_16, %c0_17, %c0_18] : memref<1x1x64xf32, #tpu.memory_space<vmem>>, vector<1x1x64xf32>
    %31 = vector.shape_cast %30 : vector<1x1x64xf32> to vector<1x64xf32>
    %32 = vector.broadcast %31 : vector<1x64xf32> to vector<16x64xf32>
    %33 = arith.addf %29, %32 : vector<16x64xf32>
    %c0_19 = arith.constant 0 : index
    %c0_20 = arith.constant 0 : index
    %c0_21 = arith.constant 0 : index
    %34 = vector.load %arg6[%c0_19, %c0_20, %c0_21] : memref<1x64x1xf32, #tpu.memory_space<vmem>>, vector<1x64x1xf32>
    %35 = vector.shape_cast %34 : vector<1x64x1xf32> to vector<64x1xf32>
    %cst_22 = arith.constant dense<0.000000e+00> : vector<16x1xf32>
    %36 = tpu.matmul %33, %35, %cst_22 {dimension_numbers = #tpu.dot_dimension_numbers<[1], [0], [0], [1], [0, 0, 1, 1], [], []>} : vector<16x64xf32>, vector<64x1xf32>, vector<16x1xf32> -> vector<16x1xf32>
    %c0_23 = arith.constant 0 : index
    %c0_24 = arith.constant 0 : index
    %c0_25 = arith.constant 0 : index
    %37 = vector.load %arg7[%c0_23, %c0_24, %c0_25] : memref<1x1x1xf32, #tpu.memory_space<vmem>>, vector<1x1x1xf32>
    %38 = vector.shape_cast %37 : vector<1x1x1xf32> to vector<1x1xf32>
    %39 = vector.broadcast %38 : vector<1x1xf32> to vector<16x1xf32>
    %40 = arith.addf %36, %39 : vector<16x1xf32>
    %c0_26 = arith.constant 0 : index
    %c0_27 = arith.constant 0 : index
    %41 = vector.load %arg8[%c0_26, %c0_27] : memref<16x1xf32, #tpu.memory_space<vmem>>, vector<16x1xf32>
    tpu.vector_store %arg8[%c0_26, %c0_27], %40 {strides = array<i32>} : memref<16x1xf32, #tpu.memory_space<vmem>>, vector<16x1xf32>,
    return
  }
  func.func @transform_0(%arg0: i32) -> (i32, i32) {
    %c0_i32 = arith.constant 0 : i32
    %c0_i32_0 = arith.constant 0 : i32
    return %arg0, %c0_i32 : i32, i32
  }
  func.func @transform_1(%arg0: i32) -> (i32, i32, i32) {
    %c0_i32 = arith.constant 0 : i32
    %c0_i32_0 = arith.constant 0 : i32
    %c0_i32_1 = arith.constant 0 : i32
    %c0_i32_2 = arith.constant 0 : i32
    return %c0_i32, %c0_i32_0, %c0_i32_1 : i32, i32, i32
  }
  func.func @transform_2(%arg0: i32) -> (i32, i32, i32) {
    %c0_i32 = arith.constant 0 : i32
    %c0_i32_0 = arith.constant 0 : i32
    %c0_i32_1 = arith.constant 0 : i32
    %c0_i32_2 = arith.constant 0 : i32
    return %c0_i32, %c0_i32_0, %c0_i32_1 : i32, i32, i32
  }
  func.func @transform_3(%arg0: i32) -> (i32, i32, i32) {
    %c0_i32 = arith.constant 0 : i32
    %c0_i32_0 = arith.constant 0 : i32
    %c0_i32_1 = arith.constant 0 : i32
    %c0_i32_2 = arith.constant 0 : i32
    return %c0_i32, %c0_i32_0, %c0_i32_1 : i32, i32, i32
  }
  func.func @transform_4(%arg0: i32) -> (i32, i32, i32) {
    %c0_i32 = arith.constant 0 : i32
    %c0_i32_0 = arith.constant 0 : i32
    %c0_i32_1 = arith.constant 0 : i32
    %c0_i32_2 = arith.constant 0 : i32
    return %c0_i32, %c0_i32_0, %c0_i32_1 : i32, i32, i32
  }
  func.func @transform_5(%arg0: i32) -> (i32, i32, i32) {
    %c0_i32 = arith.constant 0 : i32
    %c0_i32_0 = arith.constant 0 : i32
    %c0_i32_1 = arith.constant 0 : i32
    %c0_i32_2 = arith.constant 0 : i32
    return %c0_i32, %c0_i32_0, %c0_i32_1 : i32, i32, i32
  }
  func.func @transform_6(%arg0: i32) -> (i32, i32, i32) {
    %c0_i32 = arith.constant 0 : i32
    %c0_i32_0 = arith.constant 0 : i32
    %c0_i32_1 = arith.constant 0 : i32
    %c0_i32_2 = arith.constant 0 : i32
    return %c0_i32, %c0_i32_0, %c0_i32_1 : i32, i32, i32
  }
  func.func @transform_7(%arg0: i32) -> (i32, i32) {
    %c0_i32 = arith.constant 0 : i32
    %c0_i32_0 = arith.constant 0 : i32
    return %arg0, %c0_i32 : i32, i32
  }
}

</mosaic_0001>

<llo_original>
// kernel: tpu_custom_call.1
$region0: #{tpu_custom_call.1}
  #allocation0 [shape = 'u32[]', space=smem, size = 0x4, offset = 0x4, fixed_abs, tag = 'smem constant byte address 0x4 - core index']
  #allocation1 [shape = 'u32[72,128]{1,0:T(1,128)}', space=vmem, size = 0x9000, scoped, tag = 'internal scratch']
  #allocation2 [shape = 'f32[1,1,1]{2,1,0:T(1,128)S(1)}', space=vmem, size = 0x200, scoped, tag = 'scoped memory for tpu_custom_call.1']
  %s0 = inlined_call_operand.vmem [shape: f32[16,32], index: 0, kind: input, shape index: {}]
  %s1 = inlined_call_operand.vmem [shape: f32[1,32,64], index: 1, kind: input, shape index: {}]
  %s2 = inlined_call_operand.vmem [shape: f32[1,1,64], index: 2, kind: input, shape index: {}]
  %s3 = inlined_call_operand.vmem [shape: f32[1,1,64], index: 3, kind: input, shape index: {}]
  %s4 = inlined_call_operand.vmem [shape: f32[1,1,64], index: 4, kind: input, shape index: {}]
  %s5 = inlined_call_operand.vmem [shape: f32[1,64,1], index: 5, kind: input, shape index: {}]
  %s6 = inlined_call_operand.<no memory space> [shape: f32[1,1,1], index: 6, kind: input, shape index: {}]
  %s7 = inlined_call_operand.vmem [shape: f32[16,1], index: 7, kind: output, shape index: {}]
  %s8 = sld [smem:[#allocation0]]
  $region38: #{tpu_custom_call.1} parent=0
    _
  %s10 = ssub.s32 1, %s8
  %s11 = scalar_select 0, %s10, %s8
  %v12 = vstv %s6
  %13 = vst [vmem:[#allocation2] sm:$0x1] %v12
  // Predicated region
  $region2: #{tpu_custom_call.1} parent=0 // pred_check
    _
  $region3: #{tpu_custom_call.1} parent=0 // pred_check_branch
    %15 = sbr.rel (0) target = $region5
  $region4: #{tpu_custom_call.1} parent=0 // pred_region
    _
  $region5: #{tpu_custom_call.1} parent=0 // pred_fallthru
    _
  // Predicated region
  $region6: #{tpu_custom_call.1} parent=0 // pred_check
    _
  $region7: #{tpu_custom_call.1} parent=0 // pred_check_branch
    %17 = sbr.rel (0) target = $region9
  $region8: #{tpu_custom_call.1} parent=0 // pred_region
    _
  $region9: #{tpu_custom_call.1} parent=0 // pred_fallthru
    _
  // Predicated region
  $region10: #{tpu_custom_call.1} parent=0 // pred_check
    _
  $region11: #{tpu_custom_call.1} parent=0 // pred_check_branch
    %19 = sbr.rel (0) target = $region13
  $region12: #{tpu_custom_call.1} parent=0 // pred_region
    _
  $region13: #{tpu_custom_call.1} parent=0 // pred_fallthru
    _
  // Predicated region
  $region14: #{tpu_custom_call.1} parent=0 // pred_check
    _
  $region15: #{tpu_custom_call.1} parent=0 // pred_check_branch
    %21 = sbr.rel (0) target = $region17
  $region16: #{tpu_custom_call.1} parent=0 // pred_region
    _
  $region17: #{tpu_custom_call.1} parent=0 // pred_fallthru
    _
  // Predicated region
  $region18: #{tpu_custom_call.1} parent=0 // pred_check
    _
  $region19: #{tpu_custom_call.1} parent=0 // pred_check_branch
    %23 = sbr.rel (0) target = $region21
  $region20: #{tpu_custom_call.1} parent=0 // pred_region
    _
  $region21: #{tpu_custom_call.1} parent=0 // pred_fallthru
    _
  // Predicated region
  $region22: #{tpu_custom_call.1} parent=0 // pred_check
    _
  $region23: #{tpu_custom_call.1} parent=0 // pred_check_branch
    %25 = sbr.rel (0) target = $region25
  $region24: #{tpu_custom_call.1} parent=0 // pred_region
    _
  $region25: #{tpu_custom_call.1} parent=0 // pred_fallthru
    _
  // Predicated region
  $region26: #{tpu_custom_call.1} parent=0 // pred_check
    _
  $region27: #{tpu_custom_call.1} parent=0 // pred_check_branch
    %27 = sbr.rel (0) target = $region29
  $region28: #{tpu_custom_call.1} parent=0 // pred_region
    _
  $region29: #{tpu_custom_call.1} parent=0 // pred_fallthru
    _
  %v28 = vld [vmem:[%s0] sm:$0xff]
  %v29 = vld [vmem:[%s0 + $0x8] sm:$0xff]
  %v30 = vld [vmem:[%s1] sm:$0xff]
  %v31 = vld [vmem:[%s1 + $0x8] sm:$0xff]
  %v32 = vld [vmem:[%s1 + $0x10] sm:$0xff]
  %v33 = vld [vmem:[%s1 + $0x18] sm:$0xff]
  %v34 = vld [vmem:[%s2] sm:$0x1]
  %v36 = vperm.slane %v34, 0
  %vm38 = vcmask 261120
  %v40 = vsel %vm38, %v28, 0
  %v43 = vsel %vm38, %v29, 0
  %45 = vmatpush.msra.mxu0 0.0
  %46 = vmatpush.msra.mxu0 0.0
  %47 = vmatpush.msra.mxu0 0.0
  %48 = vmatpush.msra.mxu0 0.0
  %49 = vmatpush.msra.mxu0 0.0
  %50 = vmatpush.msra.mxu0 0.0
  %51 = vmatpush.msra.mxu0 0.0
  %52 = vmatpush.msra.mxu0 0.0
  %53 = vmatpush.msra.mxu0 0.0
  %54 = vmatpush.msra.mxu0 0.0
  %55 = vmatpush.msra.mxu0 0.0
  %56 = vmatpush.msra.mxu0 0.0
  %57 = vmatpush.msra.mxu0 %v33
  %58 = vmatpush.msra.mxu0 %v32
  %59 = vmatpush.msra.mxu0 %v31
  %60 = vmatpush.msra.mxu0 %v30
  %61 = vmatmul.f32.gmra.mxu0 %v40
  %v62 = vpop.f32.mrf.mxu0
  %v63 = vadd.f32 %v36, %v62
  %64 = vmatmul.f32.gmra.mxu0 %v43
  %v65 = vpop.f32.mrf.mxu0
  %v66 = vadd.f32 %v36, %v65
  %67 = vdwg.mxu0
  %v68 = vmax.f32 %v63, 0.0
  %v69 = vmax.f32 %v66, 0.0
  %vm70 = vcmask 523264
  %v71 = vsel %vm70, %v68, 0.0
  %72 = vadd.xlane.f32.xlu0 %v71
  %v73 = vpop.xlane.xlu0 %72
  %v74 = vsel %vm70, %v69, 0.0
  %75 = vadd.xlane.f32.xlu0 %v74
  %v76 = vpop.xlane.xlu0 %75
  %v77 = vrcp.pop 64.0
  %v78 = vmul.f32 64.0, %v77
  %v79 = vsub.f32 1.0, %v78
  %v80 = vmul.f32 %v77, %v79
  %v81 = vadd.f32 %v77, %v80
  %vm82 = vweird.f32 %v77
  %v83 = vsel %vm82, %v77, %v81
  %v84 = vmul.f32 %v73, %v83
  %v85 = vmul.f32 %v76, %v83
  %v86 = vsub.f32 %v68, %v84
  %v87 = vsub.f32 %v69, %v85
  %v88 = vmul.f32 %v86, %v86
  %v89 = vmul.f32 %v87, %v87
  %v90 = vsel %vm70, %v88, 0.0
  %91 = vadd.xlane.f32.xlu0 %v90
  %v92 = vpop.xlane.xlu0 %91
  %v93 = vsel %vm70, %v89, 0.0
  %94 = vadd.xlane.f32.xlu0 %v93
  %v95 = vpop.xlane.xlu0 %94
  %v96 = vmul.f32 %v92, %v83
  %v97 = vmul.f32 %v95, %v83
  %v98 = vld [vmem:[%s3] sm:$0x1]
  %v99 = vadd.f32 %v96, 1e-12
  %v100 = vadd.f32 %v97, 1e-12
  %v101 = vrsqrt.pop %v99
  %v102 = vmul.f32 %v101, %v99
  %v103 = vmul.f32 %v102, %v101
  %v104 = vmul.f32 0.5, %v103
  %v105 = vsub.f32 1.5, %v104
  %v106 = vmul.f32 %v101, %v105
  %vm107 = vweird.f32 %v99
  %vm108 = vweird.f32 %v101
  %vm109 = vmor %vm107, %vm108
  %v110 = vsel %vm109, %v101, %v106
  %v111 = vrsqrt.pop %v100
  %v112 = vmul.f32 %v111, %v100
  %v113 = vmul.f32 %v112, %v111
  %v114 = vmul.f32 0.5, %v113
  %v115 = vsub.f32 1.5, %v114
  %v116 = vmul.f32 %v111, %v115
  %vm117 = vweird.f32 %v100
  %vm118 = vweird.f32 %v111
  %vm119 = vmor %vm117, %vm118
  %v120 = vsel %vm119, %v111, %v116
  %v121 = vmul.f32 %v86, %v110
  %v122 = vmul.f32 %v87, %v120
  %v124 = vperm.slane %v98, 0
  %v126 = vmul.f32 %v124, %v121
  %v127 = vmul.f32 %v124, %v122
  %v128 = vld [vmem:[%s4] sm:$0x1]
  %v130 = vperm.slane %v128, 0
  %v132 = vadd.f32 %v126, %v130
  %v133 = vadd.f32 %v127, %v130
  %v134 = vld [vmem:[%s5] sm:$0xff]
  %v135 = vld [vmem:[%s5 + $0x8] sm:$0xff]
  %v136 = vld [vmem:[%s5 + $0x10] sm:$0xff]
  %v137 = vld [vmem:[%s5 + $0x18] sm:$0xff]
  %v138 = vld [vmem:[%s5 + $0x20] sm:$0xff]
  %v139 = vld [vmem:[%s5 + $0x28] sm:$0xff]
  %v140 = vld [vmem:[%s5 + $0x30] sm:$0xff]
  %v141 = vld [vmem:[%s5 + $0x38] sm:$0xff]
  %v142 = vld [vmem:[#allocation2] sm:$0x1]
  %v144 = vperm.slane %v142, 0
  %v147 = vsel %vm70, %v132, 0
  %v150 = vsel %vm70, %v133, 0
  %152 = vmatpush.msra.mxu0 0.0
  %153 = vmatpush.msra.mxu0 0.0
  %154 = vmatpush.msra.mxu0 0.0
  %155 = vmatpush.msra.mxu0 0.0
  %156 = vmatpush.msra.mxu0 0.0
  %157 = vmatpush.msra.mxu0 0.0
  %158 = vmatpush.msra.mxu0 0.0
  %159 = vmatpush.msra.mxu0 0.0
  %160 = vmatpush.msra.mxu0 %v141
  %161 = vmatpush.msra.mxu0 %v140
  %162 = vmatpush.msra.mxu0 %v139
  %163 = vmatpush.msra.mxu0 %v138
  %164 = vmatpush.msra.mxu0 %v137
  %165 = vmatpush.msra.mxu0 %v136
  %166 = vmatpush.msra.mxu0 %v135
  %167 = vmatpush.msra.mxu0 %v134
  %168 = vmatmul.f32.gmra.mxu0 %v147
  %v169 = vpop.f32.mrf.mxu0
  %v170 = vadd.f32 %v144, %v169
  %171 = vmatmul.f32.gmra.mxu0 %v150
  %v172 = vpop.f32.mrf.mxu0
  %v173 = vadd.f32 %v144, %v172
  %174 = vdwg.mxu0
  %vm175 = vcmask 7168
  %176 = vst.msk [vmem:[%s7] sm:$0xff] %vm175, %v170
  %177 = vst.msk [vmem:[%s7 + $0x8] sm:$0xff] %vm175, %v173
  // Predicated region
  $region30: #{tpu_custom_call.1} parent=0 // pred_check
    _
  $region31: #{tpu_custom_call.1} parent=0 // pred_check_branch
    %179 = sbr.rel (0) target = $region33
  $region32: #{tpu_custom_call.1} parent=0 // pred_region
    _
  $region33: #{tpu_custom_call.1} parent=0 // pred_fallthru
    _
  // Predicated region
  $region34: #{tpu_custom_call.1} parent=0 // pred_check
    _
  $region35: #{tpu_custom_call.1} parent=0 // pred_check_branch
    %181 = sbr.rel (0) target = $region37
  $region36: #{tpu_custom_call.1} parent=0 // pred_region
    _
  $region37: #{tpu_custom_call.1} parent=0 // pred_fallthru
    _

</llo_original>
